<compile_context>
chip_gen: v7x
topology: tpu7x:2x2x1
jax: 0.10.0
libtpu: 0.0.40
codegen_flags: <defaults>
</compile_context>

<pallas_src>
import jax
import jax.numpy as jnp
import numpy as np
from jax.experimental import pallas as pl
from jax.experimental.pallas import tpu as pltpu


# ----------------------------------------------------------------------------
# Pallas kernel
# ----------------------------------------------------------------------------
def _down_block_kernel(xr_ref, x1_ref, w_ref, wa_ref, wb_ref, p_ref, o_ref):
    # xr_ref : (7*Cin, BN) bf16  one-ring pooled features; row = k*Cin+c, col = b*Nl+n
    # x1_ref : (Co, BN)    bf16  skip features (transposed)
    # w_ref  : (Co, 7*Cin) bf16  Linear weight (out, in) layout (bias dropped: no-op pre-BN)
    # wa_ref : (Co, Co)    bf16  Conv1d weight half acting on the BN/LeakyReLU branch
    # wb_ref : (Co, Co)    bf16  Conv1d weight half acting on the x1 skip branch
    # p_ref  : (Co, 3)     f32   packed per-channel params [gamma | beta | conv bias]
    # o_ref  : (Co, BN)          output (lane-dense external contract)

    # One-ring conv == Linear(7*Cin -> Co), lane-dense, f32 accumulation.
    h = jnp.dot(w_ref[...], xr_ref[...],
                preferred_element_type=jnp.float32)                 # (Co, BN)

    # Independent skip-branch matmul — no dependence on BN, its MXU push can
    # overlap the elementwise work below.
    skip = jnp.dot(wb_ref[...], x1_ref[...],
                   preferred_element_type=jnp.float32)              # (Co, BN)

    p = p_ref[...]                                                  # (Co, 3)
    gamma = p[:, 0:1]
    beta = p[:, 1:2]
    b_c = p[:, 2:3]

    # BatchNorm1d (batch stats over all columns, biased variance, eps=1e-5),
    # folded into a single scale/shift; f32 math, rsqrt on the EUP.
    inv_n = 1.0 / h.shape[1]
    mu = jnp.sum(h, axis=1, keepdims=True) * inv_n                  # (Co, 1)
    ex2 = jnp.sum(h * h, axis=1, keepdims=True) * inv_n             # (Co, 1)
    var = jnp.maximum(ex2 - mu * mu, 0.0)
    s = gamma * jax.lax.rsqrt(var + 1e-5)
    t = beta - mu * s
    hn = h * s + t

    # LeakyReLU(0.2): slope < 1 so max(x, 0.2*x) is exact.
    hn = jnp.maximum(hn, 0.2 * hn)

    # concat([hn, x1]) + Conv1d(2*Co -> Co, k=1)  ==  Wa@hn + Wb@x1 + b_c.
    o_ref[...] = (skip
                  + jnp.dot(wa_ref[...], hn.astype(jnp.bfloat16),
                            preferred_element_type=jnp.float32)
                  + b_c).astype(o_ref.dtype)


# ----------------------------------------------------------------------------
# Wrapper (glue: pool-first, one flat gather, layout conversion, pallas_call)
# ----------------------------------------------------------------------------
def hierarchical_down_block(x, x1, params, neigh_orders, pool_neigh_orders,
                            out_dtype=jnp.float32):
    """Returns the lane-dense (Co, B*Nl) output (the block's external contract).

    Convert to PyTorch NCW with:  out.reshape(Co, B, Nl).transpose(1, 0, 2).
    """
    B, Cin, Nh = x.shape
    Nl = (Nh + 6) // 4                      # number of pooled (coarse) nodes
    Co = params["w_lin"].shape[1]

    # --- pool FIRST (tiny (B,Cin,Nl) reduction), then gather only the 7
    #     one-ring neighbours of the pooled tensor.
    poolr = pool_neigh_orders[: Nl * 7].reshape(Nl, 7)        # [n, m] -> fine node id
    pooled = jnp.mean(x[:, :, poolr], axis=-1)                # (B, Cin, Nl)

    # --- single flat gather producing xr directly in the lane-dense layout:
    #     xr[k*Cin + c, b*Nl + n] = pooled[b, c, neigh[n, k]]
    neigh = neigh_orders.reshape(Nl, 7).astype(jnp.int32)     # [n, k] -> pooled node id
    c_off = (jnp.arange(Cin, dtype=jnp.int32) * Nl).reshape(1, Cin, 1, 1)
    b_off = (jnp.arange(B, dtype=jnp.int32) * (Cin * Nl)).reshape(1, 1, B, 1)
    n_off = jnp.transpose(neigh).reshape(7, 1, 1, Nl)         # neigh[n,k] at [k,...,n]
    idx = (c_off + b_off + n_off).reshape(7 * Cin, B * Nl)
    xr = jnp.take(pooled.reshape(-1), idx, axis=0).astype(jnp.bfloat16)

    # x1: (B, Co, Nl) -> (Co, B*Nl), bf16 MXU operand.
    x1t = jnp.transpose(x1, (1, 0, 2)).reshape(Co, B * Nl).astype(jnp.bfloat16)

    # Weights: bf16 MXU operands; per-channel f32 params packed into one ref.
    w_t = params["w_lin"].T.astype(jnp.bfloat16)              # (Co, 7*Cin)
    wa = params["wc_a"].T.astype(jnp.bfloat16)                # (Co, Co) acts on hn
    wb = params["wc_b"].T.astype(jnp.bfloat16)                # (Co, Co) acts on x1
    pk = jnp.stack([params["gamma"].reshape(Co),
                    params["beta"].reshape(Co),
                    params["b_c"].reshape(Co)],
                   axis=1).astype(jnp.float32)                # (Co, 3)

    vmem = pl.BlockSpec(memory_space=pltpu.MemorySpace.VMEM)
    out = pl.pallas_call(
        _down_block_kernel,
        out_shape=jax.ShapeDtypeStruct((Co, B * Nl), out_dtype),
        in_specs=[vmem] * 6,
        out_specs=vmem,
    )(xr, x1t, w_t, wa, wb, pk)

    return out                                                # (Co, B*Nl)


# ----------------------------------------------------------------------------
# Pure-JAX f32 reference (mirrors the PyTorch forward exactly) for verification
# ----------------------------------------------------------------------------
def reference(x, x1, params, neigh_orders, pool_neigh_orders):
    B, Cin, Nh = x.shape
    Nl = (Nh + 6) // 4
    Co = params["w_lin"].shape[1]

    # pool_layer_batch (mean)
    pooled = x[:, :, pool_neigh_orders[: Nl * 7]].reshape(B, Cin, Nl, 7).mean(-1)
    # onering_conv_layer_batch (includes the Linear bias)
    mat = pooled[:, :, neigh_orders].reshape(B, Cin, Nl, 7)
    mat = jnp.transpose(mat, (0, 2, 3, 1)).reshape(B, Nl, 7 * Cin)
    h = mat @ params["w_lin"] + params["b_lin"]               # (B, Nl, Co)
    h = jnp.transpose(h, (0, 2, 1))                           # (B, Co, Nl)
    # BatchNorm1d (batch stats, biased variance, eps=1e-5)
    mu = h.mean(axis=(0, 2), keepdims=True)
    var = ((h - mu) ** 2).mean(axis=(0, 2), keepdims=True)
    hn = (h - mu) / jnp.sqrt(var + 1e-5)
    hn = hn * params["gamma"].reshape(1, Co, 1) + params["beta"].reshape(1, Co, 1)
    # LeakyReLU(0.2)
    hn = jnp.where(hn >= 0, hn, 0.2 * hn)
    # concat + Conv1d(k=1), split into the two halves
    out = (jnp.einsum("co,bcn->bon", params["wc_a"], hn)
           + jnp.einsum("co,bcn->bon", params["wc_b"], x1)
           + params["b_c"].reshape(1, Co, 1))
    return out


# ----------------------------------------------------------------------------
# Main
# ----------------------------------------------------------------------------
if __name__ == "__main__":
    B, in_ch, out_ch = 2, 8, 16
    N_high = 506                     # icosphere level: (506 + 6) / 4 = 128 pooled nodes
    N_low = (N_high + 6) // 4        # 128

    key = jax.random.PRNGKey(0)
    ks = jax.random.split(key, 12)

    # deterministic synthetic parameters (shapes from the module __init__)
    params = {
        # nn.Linear(7*in_ch, out_ch): stored as W^T so the reference does mat @ W
        "w_lin": jax.random.normal(ks[0], (7 * in_ch, out_ch), jnp.float32) * 0.05,
        "b_lin": jax.random.normal(ks[1], (1, out_ch), jnp.float32) * 0.05,
        # BatchNorm1d affine params
        "gamma": 1.0 + 0.1 * jax.random.normal(ks[2], (1, out_ch), jnp.float32),
        "beta": 0.1 * jax.random.normal(ks[3], (1, out_ch), jnp.float32),
        # Conv1d(2*out_ch, out_ch, k=1): weight split into the two concat halves,
        # stored transposed (in, out)
        "wc_a": jax.random.normal(ks[4], (out_ch, out_ch), jnp.float32) * 0.1,
        "wc_b": jax.random.normal(ks[5], (out_ch, out_ch), jnp.float32) * 0.1,
        "b_c": jax.random.normal(ks[6], (1, out_ch), jnp.float32) * 0.05,
    }

    # deterministic synthetic neighbourhood tables
    neigh_orders = jax.random.randint(ks[7], (N_low * 7,), 0, N_low, jnp.int32)
    pool_neigh_orders = jax.random.randint(ks[8], (N_low * 7,), 0, N_high, jnp.int32)

    # inputs: x at the fine level (NCW), x1 skip-features at the coarse level
    x = jax.random.normal(ks[9], (B, in_ch, N_high), jnp.float32)
    x1 = jax.random.normal(ks[10], (B, out_ch, N_low), jnp.float32)

    out = hierarchical_down_block(x, x1, params, neigh_orders, pool_neigh_orders)
    out = jax.block_until_ready(out)

    ref = jax.block_until_ready(
        reference(x, x1, params, neigh_orders, pool_neigh_orders))

    assert out.shape == (out_ch, B * N_low), out.shape
    # Convert the lane-dense block contract back to PyTorch NCW for comparison
    # (verification only; downstream blocks consume (Co, B*Nl) directly).
    out_ncw = jnp.transpose(out.reshape(out_ch, B, N_low), (1, 0, 2))
    # Tolerance accounts for bf16 matmul operands (f32 accumulation), the
    # E[x^2]-mu^2 variance rewrite and the dropped (mathematically no-op)
    # pre-BN Linear bias vs. the full-f32 reference.
    np.testing.assert_allclose(np.asarray(out_ncw), np.asarray(ref),
                               rtol=2e-2, atol=2e-2)

    print("KERNEL_OK")
</pallas_src>

<mosaic_0001>
module attributes {stable_mosaic.version = 11 : i64} {
  func.func @_down_block_kernel(%arg0: memref<56x256xbf16, #tpu.memory_space<vmem>>, %arg1: memref<16x256xbf16, #tpu.memory_space<vmem>>, %arg2: memref<16x56xbf16, #tpu.memory_space<vmem>>, %arg3: memref<16x16xbf16, #tpu.memory_space<vmem>>, %arg4: memref<16x16xbf16, #tpu.memory_space<vmem>>, %arg5: memref<16x3xf32, #tpu.memory_space<vmem>>, %arg6: memref<16x256xf32, #tpu.memory_space<vmem>>) attributes {dimension_semantics = [], scalar_prefetch = 0 : i64, scratch_operands = 0 : i64, tpu.core_type = #tpu.core_type<tc>} {
    %c0 = arith.constant 0 : index
    %c0_0 = arith.constant 0 : index
    %0 = vector.load %arg2[%c0, %c0_0] : memref<16x56xbf16, #tpu.memory_space<vmem>>, vector<16x56xbf16>
    %c0_1 = arith.constant 0 : index
    %c0_2 = arith.constant 0 : index
    %1 = vector.load %arg0[%c0_1, %c0_2] : memref<56x256xbf16, #tpu.memory_space<vmem>>, vector<56x256xbf16>
    %cst = arith.constant dense<0.000000e+00> : vector<16x256xf32>
    %2 = tpu.matmul %0, %1, %cst {dimension_numbers = #tpu.dot_dimension_numbers<[1], [0], [0], [1], [0, 0, 1, 1], [], []>} : vector<16x56xbf16>, vector<56x256xbf16>, vector<16x256xf32> -> vector<16x256xf32>
    %c0_3 = arith.constant 0 : index
    %c0_4 = arith.constant 0 : index
    %3 = vector.load %arg4[%c0_3, %c0_4] : memref<16x16xbf16, #tpu.memory_space<vmem>>, vector<16x16xbf16>
    %c0_5 = arith.constant 0 : index
    %c0_6 = arith.constant 0 : index
    %4 = vector.load %arg1[%c0_5, %c0_6] : memref<16x256xbf16, #tpu.memory_space<vmem>>, vector<16x256xbf16>
    %cst_7 = arith.constant dense<0.000000e+00> : vector<16x256xf32>
    %5 = tpu.matmul %3, %4, %cst_7 {dimension_numbers = #tpu.dot_dimension_numbers<[1], [0], [0], [1], [0, 0, 1, 1], [], []>} : vector<16x16xbf16>, vector<16x256xbf16>, vector<16x256xf32> -> vector<16x256xf32>
    %c0_8 = arith.constant 0 : index
    %c0_9 = arith.constant 0 : index
    %6 = vector.load %arg5[%c0_8, %c0_9] : memref<16x3xf32, #tpu.memory_space<vmem>>, vector<16x3xf32>
    %7 = vector.extract_strided_slice %6 {offsets = [0, 0], sizes = [16, 1], strides = [1, 1]} : vector<16x3xf32> to vector<16x1xf32>
    %8 = vector.extract_strided_slice %6 {offsets = [0, 1], sizes = [16, 1], strides = [1, 1]} : vector<16x3xf32> to vector<16x1xf32>
    %9 = vector.extract_strided_slice %6 {offsets = [0, 2], sizes = [16, 1], strides = [1, 1]} : vector<16x3xf32> to vector<16x1xf32>
    %cst_10 = arith.constant dense<0.000000e+00> : vector<16xf32>
    %10 = vector.multi_reduction <add>, %2, %cst_10 [1] : vector<16x256xf32> to vector<16xf32>
    %11 = vector.shape_cast %10 : vector<16xf32> to vector<16x1xf32>
    %cst_11 = arith.constant 3.906250e-03 : f32
    %12 = vector.broadcast %cst_11 : f32 to vector<16x1xf32>
    %13 = arith.mulf %11, %12 : vector<16x1xf32>
    %14 = arith.mulf %2, %2 : vector<16x256xf32>
    %cst_12 = arith.constant dense<0.000000e+00> : vector<16xf32>
    %15 = vector.multi_reduction <add>, %14, %cst_12 [1] : vector<16x256xf32> to vector<16xf32>
    %16 = vector.shape_cast %15 : vector<16xf32> to vector<16x1xf32>
    %cst_13 = arith.constant 3.906250e-03 : f32
    %17 = vector.broadcast %cst_13 : f32 to vector<16x1xf32>
    %18 = arith.mulf %16, %17 : vector<16x1xf32>
    %19 = arith.mulf %13, %13 : vector<16x1xf32>
    %20 = arith.subf %18, %19 : vector<16x1xf32>
    %cst_14 = arith.constant 0.000000e+00 : f32
    %21 = vector.broadcast %cst_14 : f32 to vector<16x1xf32>
    %22 = arith.maximumf %20, %21 : vector<16x1xf32>
    %cst_15 = arith.constant 9.99999974E-6 : f32
    %23 = vector.broadcast %cst_15 : f32 to vector<16x1xf32>
    %24 = arith.addf %22, %23 : vector<16x1xf32>
    %25 = math.rsqrt %24 : vector<16x1xf32>
    %26 = arith.mulf %7, %25 : vector<16x1xf32>
    %27 = arith.mulf %13, %26 : vector<16x1xf32>
    %28 = arith.subf %8, %27 : vector<16x1xf32>
    %29 = vector.broadcast %26 : vector<16x1xf32> to vector<16x256xf32>
    %30 = arith.mulf %2, %29 : vector<16x256xf32>
    %31 = vector.broadcast %28 : vector<16x1xf32> to vector<16x256xf32>
    %32 = arith.addf %30, %31 : vector<16x256xf32>
    %cst_16 = arith.constant 2.000000e-01 : f32
    %33 = vector.broadcast %cst_16 : f32 to vector<16x256xf32>
    %34 = arith.mulf %33, %32 : vector<16x256xf32>
    %35 = arith.maximumf %32, %34 : vector<16x256xf32>
    %c0_17 = arith.constant 0 : index
    %c0_18 = arith.constant 0 : index
    %36 = vector.load %arg3[%c0_17, %c0_18] : memref<16x16xbf16, #tpu.memory_space<vmem>>, vector<16x16xbf16>
    %37 = arith.truncf %35 : vector<16x256xf32> to vector<16x256xbf16>
    %cst_19 = arith.constant dense<0.000000e+00> : vector<16x256xf32>
    %38 = tpu.matmul %36, %37, %cst_19 {dimension_numbers = #tpu.dot_dimension_numbers<[1], [0], [0], [1], [0, 0, 1, 1], [], []>} : vector<16x16xbf16>, vector<16x256xbf16>, vector<16x256xf32> -> vector<16x256xf32>
    %39 = arith.addf %5, %38 : vector<16x256xf32>
    %40 = vector.broadcast %9 : vector<16x1xf32> to vector<16x256xf32>
    %41 = arith.addf %39, %40 : vector<16x256xf32>
    %c0_20 = arith.constant 0 : index
    %c0_21 = arith.constant 0 : index
    %42 = vector.load %arg6[%c0_20, %c0_21] : memref<16x256xf32, #tpu.memory_space<vmem>>, vector<16x256xf32>
    tpu.vector_store %arg6[%c0_20, %c0_21], %41 {strides = array<i32>} : memref<16x256xf32, #tpu.memory_space<vmem>>, vector<16x256xf32>,
    return
  }
}

</mosaic_0001>

<llo_original>
// kernel: tpu_custom_call.1
$region0: #{tpu_custom_call.1}
  #allocation0 [shape = 'u32[]', space=smem, size = 0x4, offset = 0x4, fixed_abs, tag = 'smem constant byte address 0x4 - core index']
  #allocation1 [shape = 'u32[144,128]{1,0:T(1,128)}', space=vmem, size = 0x12000, scoped, tag = 'internal scratch']
  %s0 = inlined_call_operand.hbm [shape: bf16[56,256], index: 0, kind: input, shape index: {}]
  %s1 = inlined_call_operand.vmem [shape: bf16[16,256], index: 1, kind: input, shape index: {}]
  %s2 = inlined_call_operand.vmem [shape: bf16[16,56], index: 2, kind: input, shape index: {}]
  %s3 = inlined_call_operand.hbm [shape: bf16[16,16], index: 3, kind: input, shape index: {}]
  %s4 = inlined_call_operand.vmem [shape: bf16[16,16], index: 4, kind: input, shape index: {}]
  %s5 = inlined_call_operand.vmem [shape: f32[16,3], index: 5, kind: input, shape index: {}]
  %s6 = inlined_call_operand.hbm [shape: f32[16,256], index: 6, kind: output, shape index: {}]
  %s7 = sld [smem:[#allocation0]]
  $region42: #{tpu_custom_call.1} parent=0
    _
  %s9 = ssub.s32 1, %s7
  %s10 = scalar_select 0, %s9, %s7
  $region1: #{tpu_custom_call.1} parent=0
    #allocation2 [shape = 'u8[28672]{0}', space=vmem, size = 0x7000, scoped, tag = 'input window, operand 0, single buffered']
    #allocation3 [shape = 's32[1]{0}', space=sflag, size = 0x4, scoped, tag = 'scoped memory for tpu_custom_call.1']
    #allocation4 [shape = 's32[1]{0}', space=sflag, size = 0x4, scoped, tag = 'scoped memory for tpu_custom_call.1']
    #allocation5 [shape = 'u8[4096]{0}', space=vmem, size = 0x1000, scoped, tag = 'input window, operand 3, single buffered']
    #allocation6 [shape = 's32[1]{0}', space=sflag, size = 0x4, scoped, tag = 'scoped memory for tpu_custom_call.1']
    #allocation7 [shape = 'u8[16384]{0}', space=vmem, size = 0x4000, scoped, tag = 'output window, operand 0, single buffered']
    %11 = vsyncpa [#allocation3], 0
    %12 = vsyncpa [#allocation6], 0
    %13 = vsyncpa [#allocation4], 0
    // Predicated region
    $region2: #{tpu_custom_call.1} parent=1 // pred_check
      _
    $region3: #{tpu_custom_call.1} parent=1 // pred_check_branch
      %15 = sbr.rel (0) target = $region5
    $region4: #{tpu_custom_call.1} parent=1 // pred_region
      %s17 = ssub.s32 896, 896
      %18 = vsyncadd [#allocation3], %s17
      %s19 = sshll.u32 [#allocation2], 4
      %s20 = int_to_ptr.vmem [resolvable:$true] %s19
      %25 = dma.hbm_to_vmem [thread:$0]  %s0, 896, %s20, [#allocation3], 128, 128, 8
    $region5: #{tpu_custom_call.1} parent=1 // pred_fallthru
      _
    // Predicated region
    $region6: #{tpu_custom_call.1} parent=1 // pred_check
      _
    $region7: #{tpu_custom_call.1} parent=1 // pred_check_branch
      %27 = sbr.rel (0) target = $region9
    $region8: #{tpu_custom_call.1} parent=1 // pred_region
      _
    $region9: #{tpu_custom_call.1} parent=1 // pred_fallthru
      _
    // Predicated region
    $region10: #{tpu_custom_call.1} parent=1 // pred_check
      _
    $region11: #{tpu_custom_call.1} parent=1 // pred_check_branch
      %29 = sbr.rel (0) target = $region13
    $region12: #{tpu_custom_call.1} parent=1 // pred_region
      _
    $region13: #{tpu_custom_call.1} parent=1 // pred_fallthru
      _
    // Predicated region
    $region14: #{tpu_custom_call.1} parent=1 // pred_check
      _
    $region15: #{tpu_custom_call.1} parent=1 // pred_check_branch
      %31 = sbr.rel (0) target = $region17
    $region16: #{tpu_custom_call.1} parent=1 // pred_region
      %s33 = ssub.s32 128, 128
      %34 = vsyncadd [#allocation6], %s33
      %s35 = sshll.u32 [#allocation5], 4
      %s36 = int_to_ptr.vmem [resolvable:$true] %s35
      %41 = dma.hbm_to_vmem [thread:$0]  %s3, 128, %s36, [#allocation6], 64, 64, 4
    $region17: #{tpu_custom_call.1} parent=1 // pred_fallthru
      _
    // Predicated region
    $region18: #{tpu_custom_call.1} parent=1 // pred_check
      _
    $region19: #{tpu_custom_call.1} parent=1 // pred_check_branch
      %43 = sbr.rel (0) target = $region21
    $region20: #{tpu_custom_call.1} parent=1 // pred_region
      _
    $region21: #{tpu_custom_call.1} parent=1 // pred_fallthru
      _
    // Predicated region
    $region22: #{tpu_custom_call.1} parent=1 // pred_check
      _
    $region23: #{tpu_custom_call.1} parent=1 // pred_check_branch
      %45 = sbr.rel (0) target = $region25
    $region24: #{tpu_custom_call.1} parent=1 // pred_region
      _
    $region25: #{tpu_custom_call.1} parent=1 // pred_fallthru
      _
    // Predicated region
    $region26: #{tpu_custom_call.1} parent=1 // pred_check
      _
    $region27: #{tpu_custom_call.1} parent=1 // pred_check_branch
      %47 = sbr.rel (0) target = $region29
    $region28: #{tpu_custom_call.1} parent=1 // pred_region
      %48 = dma.done [#allocation3], 896
    $region29: #{tpu_custom_call.1} parent=1 // pred_fallthru
      _
    // Predicated region
    $region30: #{tpu_custom_call.1} parent=1 // pred_check
      _
    $region31: #{tpu_custom_call.1} parent=1 // pred_check_branch
      %50 = sbr.rel (0) target = $region33
    $region32: #{tpu_custom_call.1} parent=1 // pred_region
      %51 = dma.done [#allocation6], 128
    $region33: #{tpu_custom_call.1} parent=1 // pred_fallthru
      _
    %v53 = vld [vmem:[%s2] sm:$0xf]
    %v54 = vld [vmem:[%s2 + $0x4] sm:$0xf]
    %v55 = vld [vmem:[#allocation2] sm:$0xff]
    %v56 = vld [vmem:[#allocation2 + $0x8] sm:$0xff]
    %v57 = vld [vmem:[#allocation2 + $0x10] sm:$0xff]
    %v58 = vld [vmem:[#allocation2 + $0x18] sm:$0xff]
    %v59 = vld [vmem:[#allocation2 + $0x20] sm:$0xff]
    %v60 = vld [vmem:[#allocation2 + $0x28] sm:$0xff]
    %v61 = vld [vmem:[#allocation2 + $0x30] sm:$0xff]
    %v64 = vunpack.c.l.b16 %v53
    %v65 = vunpack.c.l.b16 %v54
    %v66 = vpack.c.b16 %v65, %v64
    %v74 = vunpack.c.l.b16 %v55
    %v75 = vunpack.c.h.b16 %v55
    %v76 = vunpack.c.l.b16 %v56
    %v77 = vunpack.c.h.b16 %v56
    %v78 = vunpack.c.l.b16 %v57
    %v79 = vunpack.c.h.b16 %v57
    %v80 = vunpack.c.l.b16 %v58
    %v81 = vunpack.c.h.b16 %v58
    %v82 = vunpack.c.l.b16 %v59
    %v83 = vunpack.c.h.b16 %v59
    %v84 = vunpack.c.l.b16 %v60
    %v85 = vunpack.c.h.b16 %v60
    %v86 = vunpack.c.l.b16 %v61
    %v87 = vunpack.c.h.b16 %v61
    %v88 = vpack.c.b16 %v76, %v74
    %v89 = vpack.c.b16 %v77, %v75
    %v90 = vpack.c.b16 %v80, %v78
    %v91 = vpack.c.b16 %v81, %v79
    %v92 = vpack.c.b16 %v84, %v82
    %v93 = vpack.c.b16 %v85, %v83
    %v94 = vpack.c.b16 %v86, %v86
    %v95 = vpack.c.b16 %v87, %v87
    %vm102 = vcmask 457728
    %v104 = vsel %vm102, %v66, 0
    %vm106 = vcmask 1043456
    %v108 = vsel %vm106, %v94, 0
    %v111 = vsel %vm106, %v95, 0
    %113 = vmatprep.subr.bf16.mxu0 %v89
    %114 = vmatpush1.bf16.msra.mxu0 %v88
    %115 = vmatprep.subr.bf16.mxu0 %v91
    %116 = vmatpush1.bf16.msra.mxu0 %v90
    %117 = vmatprep.subr.bf16.mxu0 %v93
    %118 = vmatpush1.bf16.msra.mxu0 %v92
    %119 = vmatprep.subr.bf16.mxu0 %v111
    %120 = vmatpush1.bf16.msra.mxu0 %v108
    %121 = vmatprep.subr.bf16.mxu0 0
    %122 = vmatpush1.bf16.msra.mxu0 0
    %123 = vmatprep.subr.bf16.mxu0 0
    %124 = vmatpush1.bf16.msra.mxu0 0
    %125 = vmatprep.subr.bf16.mxu0 0
    %126 = vmatpush1.bf16.msra.mxu0 0
    %127 = vmatprep.subr.bf16.mxu0 0
    %128 = vmatpush1.bf16.msra.mxu0 0
    %129 = vmatprep.subr.bf16.mxu0 0
    %130 = vmatpush1.bf16.msra.mxu0 0
    %131 = vmatprep.subr.bf16.mxu0 0
    %132 = vmatpush1.bf16.msra.mxu0 0
    %133 = vmatprep.subr.bf16.mxu0 0
    %134 = vmatpush1.bf16.msra.mxu0 0
    %135 = vmatprep.subr.bf16.mxu0 0
    %136 = vmatpush1.bf16.msra.mxu0 0
    %137 = vmatprep.subr.bf16.mxu0 0
    %138 = vmatpush1.bf16.msra.mxu0 0
    %139 = vmatprep.subr.bf16.mxu0 0
    %140 = vmatpush1.bf16.msra.mxu0 0
    %141 = vmatprep.subr.bf16.mxu0 0
    %142 = vmatpush1.bf16.msra.mxu0 0
    %143 = vmatprep.subr.bf16.mxu0 0
    %144 = vmatpush1.bf16.msra.mxu0 0
    %145 = vmatprep.mubr.bf16.mxu0 0
    %146 = vmatmul.mubr.bf16.gmra.mrb[0].mxu0 %v104
    %v147 = vpop.f32.mrb[0].mxu0
    %v148 = vadd.f32 0.0, %v147
    %v149 = vpop.f32.mrb[0].mxu0
    %v150 = vadd.f32 0.0, %v149
    %v151 = vpop.f32.mrb[0].mxu0
    %v152 = vadd.f32 0.0, %v151
    %v153 = vpop.f32.mrb[0].mxu0
    %v154 = vadd.f32 0.0, %v153
    %155 = vdwg.mxu0
    %v156 = vld [vmem:[%s4] sm:$0xf]
    %v157 = vld [vmem:[%s4 + $0x4] sm:$0xf]
    %v158 = vld [vmem:[%s1] sm:$0xff]
    %v159 = vld [vmem:[%s1 + $0x8] sm:$0xff]
    %v160 = vld [vmem:[%s5] sm:$0xff]
    %v161 = vld [vmem:[%s5 + $0x8] sm:$0xff]
    %v162 = vadd.f32 %v148, %v150
    %163 = vadd.xlane.f32.xlu0 %v162
    %v164 = vpop.xlane.xlu0 %163
    %v165 = vadd.f32 %v152, %v154
    %166 = vadd.xlane.f32.xlu0 %v165
    %v167 = vpop.xlane.xlu0 %166
    %v168 = vmul.f32 %v164, 0.00390625
    %v169 = vmul.f32 %v167, 0.00390625
    %v170 = vmul.f32 %v148, %v148
    %v171 = vmul.f32 %v150, %v150
    %v172 = vmul.f32 %v152, %v152
    %v173 = vmul.f32 %v154, %v154
    %v174 = vadd.f32 %v170, %v171
    %175 = vadd.xlane.f32.xlu0 %v174
    %v176 = vpop.xlane.xlu0 %175
    %v177 = vadd.f32 %v172, %v173
    %178 = vadd.xlane.f32.xlu0 %v177
    %v179 = vpop.xlane.xlu0 %178
    %v180 = vmul.f32 %v176, 0.00390625
    %v181 = vmul.f32 %v179, 0.00390625
    %v182 = vmul.f32 %v168, %v168
    %v183 = vmul.f32 %v169, %v169
    %v184 = vsub.f32 %v180, %v182
    %v185 = vsub.f32 %v181, %v183
    %v186 = vmax.f32 %v184, 0.0
    %v187 = vmax.f32 %v185, 0.0
    %v188 = vadd.f32 %v186, 1e-05
    %v189 = vadd.f32 %v187, 1e-05
    %v190 = vrsqrt.pop %v188
    %v191 = vrsqrt.pop %v189
    %v192 = vmul.f32 %v160, %v190
    %v193 = vmul.f32 %v161, %v191
    %v194 = vmul.f32 %v168, %v192
    %v195 = vmul.f32 %v169, %v193
    %198 = vrot.lane.b32.xlu0 %v194, 1
    %v199 = vpop.permute.xlu0 %198
    %200 = vrot.lane.b32.xlu0 %v195, 1
    %v201 = vpop.permute.xlu0 %200
    %v204 = vsub.f32 %v160, %v199
    %v205 = vsub.f32 %v161, %v201
    %207 = vset.pattern.permute.xlu0 0
    %208 = vperm.xlu0 %207, %v192
    %v209 = vpop.permute.xlu0 %208
    %212 = vset.pattern.permute.xlu0 0
    %213 = vperm.xlu0 %212, %v193
    %v214 = vpop.permute.xlu0 %213
    %v216 = vmul.f32 %v148, %v209
    %v217 = vmul.f32 %v150, %v209
    %v218 = vmul.f32 %v152, %v214
    %v219 = vmul.f32 %v154, %v214
    %221 = vset.pattern.permute.xlu0 1
    %222 = vperm.xlu0 %221, %v204
    %v223 = vpop.permute.xlu0 %222
    %226 = vset.pattern.permute.xlu0 1
    %227 = vperm.xlu0 %226, %v205
    %v228 = vpop.permute.xlu0 %227
    %v230 = vadd.f32 %v216, %v223
    %v231 = vadd.f32 %v217, %v223
    %v232 = vadd.f32 %v218, %v228
    %v233 = vadd.f32 %v219, %v228
    %v234 = vmul.f32 %v230, 0.2
    %v235 = vmul.f32 %v231, 0.2
    %v236 = vmul.f32 %v232, 0.2
    %v237 = vmul.f32 %v233, 0.2
    %v238 = vmax.f32 %v230, %v234
    %v239 = vmax.f32 %v231, %v235
    %v240 = vmax.f32 %v232, %v236
    %v241 = vmax.f32 %v233, %v237
    %v242 = vld [vmem:[#allocation5] sm:$0xf]
    %v243 = vld [vmem:[#allocation5 + $0x4] sm:$0xf]
    %v244 = vpack.c.bf16 %v240, %v238
    %v245 = vpack.c.bf16 %v241, %v239
    %v248 = vunpack.c.l.b16 %v242
    %v249 = vunpack.c.l.b16 %v243
    %v250 = vpack.c.b16 %v249, %v248
    %vm251 = vcmask 130048
    %v253 = vsel %vm251, %v250, 0
    %255 = vmatprep.subr.bf16.mxu0 %v245
    %256 = vmatpush1.bf16.msra.mxu0 %v244
    %257 = vmatprep.subr.bf16.mxu0 0
    %258 = vmatpush1.bf16.msra.mxu0 0
    %259 = vmatprep.subr.bf16.mxu0 0
    %260 = vmatpush1.bf16.msra.mxu0 0
    %261 = vmatprep.subr.bf16.mxu0 0
    %262 = vmatpush1.bf16.msra.mxu0 0
    %263 = vmatprep.subr.bf16.mxu0 0
    %264 = vmatpush1.bf16.msra.mxu0 0
    %265 = vmatprep.subr.bf16.mxu0 0
    %266 = vmatpush1.bf16.msra.mxu0 0
    %267 = vmatprep.subr.bf16.mxu0 0
    %268 = vmatpush1.bf16.msra.mxu0 0
    %269 = vmatprep.subr.bf16.mxu0 0
    %270 = vmatpush1.bf16.msra.mxu0 0
    %271 = vmatprep.subr.bf16.mxu0 0
    %272 = vmatpush1.bf16.msra.mxu0 0
    %273 = vmatprep.subr.bf16.mxu0 0
    %274 = vmatpush1.bf16.msra.mxu0 0
    %275 = vmatprep.subr.bf16.mxu0 0
    %276 = vmatpush1.bf16.msra.mxu0 0
    %277 = vmatprep.subr.bf16.mxu0 0
    %278 = vmatpush1.bf16.msra.mxu0 0
    %279 = vmatprep.subr.bf16.mxu0 0
    %280 = vmatpush1.bf16.msra.mxu0 0
    %281 = vmatprep.subr.bf16.mxu0 0
    %282 = vmatpush1.bf16.msra.mxu0 0
    %283 = vmatprep.subr.bf16.mxu0 0
    %284 = vmatpush1.bf16.msra.mxu0 0
    %285 = vmatprep.subr.bf16.mxu0 0
    %286 = vmatpush1.bf16.msra.mxu0 0
    %287 = vmatprep.mubr.bf16.mxu0 0
    %288 = vmatmul.mubr.bf16.gmra.mrb[0].mxu0 %v253
    %v289 = vpop.f32.mrb[0].mxu0
    %v290 = vadd.f32 0.0, %v289
    %v291 = vpop.f32.mrb[0].mxu0
    %v292 = vadd.f32 0.0, %v291
    %v293 = vpop.f32.mrb[0].mxu0
    %v294 = vadd.f32 0.0, %v293
    %v295 = vpop.f32.mrb[0].mxu0
    %v296 = vadd.f32 0.0, %v295
    %297 = vdwg.mxu0
    %v300 = vunpack.c.l.b16 %v156
    %v301 = vunpack.c.l.b16 %v157
    %v302 = vpack.c.b16 %v301, %v300
    %v305 = vunpack.c.l.b16 %v158
    %v306 = vunpack.c.h.b16 %v158
    %v307 = vunpack.c.l.b16 %v159
    %v308 = vunpack.c.h.b16 %v159
    %v309 = vpack.c.b16 %v307, %v305
    %v310 = vpack.c.b16 %v308, %v306
    %v314 = vsel %vm251, %v302, 0
    %316 = vmatprep.subr.bf16.mxu0 %v310
    %317 = vmatpush1.bf16.msra.mxu0 %v309
    %318 = vmatprep.subr.bf16.mxu0 0
    %319 = vmatpush1.bf16.msra.mxu0 0
    %320 = vmatprep.subr.bf16.mxu0 0
    %321 = vmatpush1.bf16.msra.mxu0 0
    %322 = vmatprep.subr.bf16.mxu0 0
    %323 = vmatpush1.bf16.msra.mxu0 0
    %324 = vmatprep.subr.bf16.mxu0 0
    %325 = vmatpush1.bf16.msra.mxu0 0
    %326 = vmatprep.subr.bf16.mxu0 0
    %327 = vmatpush1.bf16.msra.mxu0 0
    %328 = vmatprep.subr.bf16.mxu0 0
    %329 = vmatpush1.bf16.msra.mxu0 0
    %330 = vmatprep.subr.bf16.mxu0 0
    %331 = vmatpush1.bf16.msra.mxu0 0
    %332 = vmatprep.subr.bf16.mxu0 0
    %333 = vmatpush1.bf16.msra.mxu0 0
    %334 = vmatprep.subr.bf16.mxu0 0
    %335 = vmatpush1.bf16.msra.mxu0 0
    %336 = vmatprep.subr.bf16.mxu0 0
    %337 = vmatpush1.bf16.msra.mxu0 0
    %338 = vmatprep.subr.bf16.mxu0 0
    %339 = vmatpush1.bf16.msra.mxu0 0
    %340 = vmatprep.subr.bf16.mxu0 0
    %341 = vmatpush1.bf16.msra.mxu0 0
    %342 = vmatprep.subr.bf16.mxu0 0
    %343 = vmatpush1.bf16.msra.mxu0 0
    %344 = vmatprep.subr.bf16.mxu0 0
    %345 = vmatpush1.bf16.msra.mxu0 0
    %346 = vmatprep.subr.bf16.mxu0 0
    %347 = vmatpush1.bf16.msra.mxu0 0
    %348 = vmatprep.mubr.bf16.mxu0 0
    %349 = vmatmul.mubr.bf16.gmra.mrb[0].mxu0 %v314
    %v350 = vpop.f32.mrb[0].mxu0
    %v351 = vadd.f32 %v290, %v350
    %v352 = vpop.f32.mrb[0].mxu0
    %v353 = vadd.f32 %v292, %v352
    %v354 = vpop.f32.mrb[0].mxu0
    %v355 = vadd.f32 %v294, %v354
    %v356 = vpop.f32.mrb[0].mxu0
    %v357 = vadd.f32 %v296, %v356
    %358 = vdwg.mxu0
    %360 = vset.pattern.permute.xlu0 2
    %361 = vperm.xlu0 %360, %v160
    %v362 = vpop.permute.xlu0 %361
    %365 = vset.pattern.permute.xlu0 2
    %366 = vperm.xlu0 %365, %v161
    %v367 = vpop.permute.xlu0 %366
    %v369 = vadd.f32 %v351, %v362
    %v370 = vadd.f32 %v353, %v362
    %v371 = vadd.f32 %v355, %v367
    %v372 = vadd.f32 %v357, %v367
    %373 = vst [vmem:[#allocation7] sm:$0xff] %v369
    %374 = vst [vmem:[#allocation7 + $0x8] sm:$0xff] %v370
    %375 = vst [vmem:[#allocation7 + $0x10] sm:$0xff] %v371
    %376 = vst [vmem:[#allocation7 + $0x18] sm:$0xff] %v372
    // Predicated region
    $region34: #{tpu_custom_call.1} parent=1 // pred_check
      _
    $region35: #{tpu_custom_call.1} parent=1 // pred_check_branch
      %378 = sbr.rel (0) target = $region37
    $region36: #{tpu_custom_call.1} parent=1 // pred_region
      %s380 = ssub.s32 512, 512
      %381 = vsyncadd [#allocation4], %s380
      %s382 = sshll.u32 [#allocation7], 4
      %s383 = int_to_ptr.vmem [resolvable:$true] %s382
      %388 = dma.vmem_to_hbm [thread:$0]  %s383, 512, %s6, [#allocation4], 256, 256, 16
    $region37: #{tpu_custom_call.1} parent=1 // pred_fallthru
      _
    // Predicated region
    $region38: #{tpu_custom_call.1} parent=1 // pred_check
      _
    $region39: #{tpu_custom_call.1} parent=1 // pred_check_branch
      %390 = sbr.rel (0) target = $region41
    $region40: #{tpu_custom_call.1} parent=1 // pred_region
      %391 = dma.done [#allocation4], 512
    $region41: #{tpu_custom_call.1} parent=1 // pred_fallthru
      _
    %392 = vsyncpa [#allocation3], 1
    %393 = vsyncpa [#allocation6], 1
    %394 = vsyncpa [#allocation4], 1

</llo_original>
